<compile_context>
chip_gen: v5e
topology: v5e:2x2
jax: 0.10.0
libtpu: 0.0.40
codegen_flags: <defaults>
</compile_context>

<pallas_src>
import functools

import jax
import jax.numpy as jnp
from jax.experimental import pallas as pl
from jax.experimental.pallas import tpu as pltpu


_LANE = 128
_TILE_TARGET_BYTES = 4 << 20   # ~4 MiB of raw input per tile (all generations)
_MIN_LANE_TILE = 512           # don't shrink tiles below this (per-step overhead)


def _layernorm_kernel(x_ref, w_ref, *rest, bias_free: bool):
    # x_ref: (1, C, T)   w_ref/b_ref: (C, 1)   o_ref: (1, C, T)
    if bias_free:
        (o_ref,) = rest
        b_ref = None
    else:
        b_ref, o_ref = rest

    x = x_ref[...].astype(jnp.float32)               # (1, C, T)
    c = x.shape[1]
    inv_c = 1.0 / float(c)

    # Centered two-pass statistics over the channel (sublane) axis.
    mu = jnp.sum(x, axis=1, keepdims=True) * inv_c   # (1, 1, T)
    d = x - mu
    var = jnp.sum(d * d, axis=1, keepdims=True) * inv_c
    inv = jax.lax.rsqrt(var + 1e-5)                  # EUP rsqrt

    w = w_ref[...].astype(jnp.float32)[None, :, :]   # (1, C, 1)
    if bias_free:
        # PyTorch BiasFree: output is NOT mean-centered (only var is centered).
        y = x * (inv * w)
    else:
        b = b_ref[...].astype(jnp.float32)[None, :, :]
        y = d * (inv * w) + b

    o_ref[...] = y.astype(o_ref.dtype)


def _round_up(v, m):
    return -(-v // m) * m


def _round_down(v, m):
    return (v // m) * m


def _pick_lane_tile(C: int, HW: int, dtype_bytes: int, B: int) -> int:
    """Lane-tile size: dtype-aware ~4 MiB target, multiple of 128, grid guards."""
    if HW <= _LANE:
        return HW  # lane dim must equal the full (short) array dim

    # 1) Byte budget: ~4 MiB of raw input per tile.
    t = _round_down(_TILE_TARGET_BYTES // max(C * dtype_bytes, 1), _LANE)
    t = max(_LANE, t)

    # 2) Grid-collapse guard: aim for >= 8 total grid steps so the DMA pipeline
    #    has prologue/epilogue overlap, but never shrink below _MIN_LANE_TILE.
    desired_steps = 8
    tiles_wanted = max(-(-desired_steps // max(B, 1)), 1)
    t_steps = _round_up(-(-HW // tiles_wanted), _LANE)
    t = min(t, max(t_steps, _MIN_LANE_TILE))

    # 3) v7x has two TensorCores: if B == 1, make sure there are >= 2 steps.
    if B == 1:
        t = min(t, _round_up(-(-HW // 2), _LANE))

    if t >= HW:
        return HW  # single full-extent tile along lanes (any HW allowed)
    return max(_LANE, t)


def _vmem_limit_bytes(C: int, lane_tile: int, dtype_bytes: int) -> int:
    io_tile = C * lane_tile * dtype_bytes       # one input (= one output) tile
    f32_tile = C * lane_tile * 4                # in-kernel f32 working copies
    need = 2 * (io_tile + io_tile) + 4 * f32_tile + (1 << 20)
    return int(min(max(need, 16 << 20), 64 << 20))


def layer_norm_pallas(x, weight, bias=None, layer_norm_type="WithBias"):
    """x: (B, C, H, W) NCHW.  weight/bias: (C,).  Returns (B, C, H, W)."""
    B, C, H, W = x.shape
    HW = H * W
    bias_free = (layer_norm_type == "BiasFree")
    dtype_bytes = jnp.dtype(x.dtype).itemsize

    x3 = x.reshape(B, C, HW)                    # free reshape: no transpose/pad
    lane_tile = _pick_lane_tile(C, HW, dtype_bytes, B)
    n_tiles = pl.cdiv(HW, lane_tile)

    tile_spec = pl.BlockSpec((1, C, lane_tile), lambda b, j: (b, 0, j))
    param_spec = pl.BlockSpec((C, 1), lambda b, j: (0, 0))

    in_specs = [tile_spec, param_spec]
    args = [x3, weight.reshape(C, 1)]
    if not bias_free:
        in_specs.append(param_spec)
        args.append(bias.reshape(C, 1))

    kernel = functools.partial(_layernorm_kernel, bias_free=bias_free)

    out = pl.pallas_call(
        kernel,
        out_shape=jax.ShapeDtypeStruct((B, C, HW), x.dtype),
        grid_spec=pltpu.PrefetchScalarGridSpec(
            num_scalar_prefetch=0,
            grid=(B, n_tiles),
            in_specs=in_specs,
            out_specs=tile_spec,
        ),
        compiler_params=pltpu.CompilerParams(
            dimension_semantics=("parallel", "parallel"),
            vmem_limit_bytes=_vmem_limit_bytes(C, lane_tile, dtype_bytes),
        ),
    )(*args)

    return out.reshape(B, C, H, W)


def layer_norm_ref(x, weight, bias, layer_norm_type="WithBias"):
    """Pure-JAX reference mirroring the PyTorch forward."""
    B, C, H, W = x.shape
    x3 = jnp.transpose(x, (0, 2, 3, 1)).reshape(B, H * W, C).astype(jnp.float32)
    mu = jnp.mean(x3, axis=-1, keepdims=True)
    var = jnp.mean((x3 - mu) ** 2, axis=-1, keepdims=True)
    if layer_norm_type == "BiasFree":
        y = x3 / jnp.sqrt(var + 1e-5) * weight
    else:
        y = (x3 - mu) / jnp.sqrt(var + 1e-5) * weight + bias
    y = y.astype(x.dtype)
    return jnp.transpose(y.reshape(B, H, W, C), (0, 3, 1, 2))


if __name__ == "__main__":
    key = jax.random.PRNGKey(0)
    ok = True

    # Case 1: module-default shapes, parameters as in __init__ (ones / zeros).
    B, C, H, W = 2, 4, 16, 16
    k1, k2, k3 = jax.random.split(key, 3)
    x = jax.random.normal(k1, (B, C, H, W), dtype=jnp.float32)
    weight = jnp.ones((C,), dtype=jnp.float32)
    bias = jnp.zeros((C,), dtype=jnp.float32)
    for ln_type in ("WithBias", "BiasFree"):
        out = jax.block_until_ready(
            layer_norm_pallas(x, weight, bias, layer_norm_type=ln_type))
        ref = layer_norm_ref(x, weight, bias, layer_norm_type=ln_type)
        err = float(jnp.max(jnp.abs(out - ref)))
        if err > 5e-5:
            ok = False
            print(f"MISMATCH (case1 {ln_type}): max abs err = {err}")

    # Case 2: B=1, non-multiple-of-128 spatial extent (exercises ragged lane
    # tiles + the >=2-step grid guard), random affine parameters.
    B2, C2, H2, W2 = 1, 48, 20, 20
    x2 = jax.random.normal(k2, (B2, C2, H2, W2), dtype=jnp.float32) * 3.0 + 1.5
    w2 = jax.random.normal(k3, (C2,), dtype=jnp.float32)
    b2 = jax.random.normal(k1, (C2,), dtype=jnp.float32)
    for ln_type in ("WithBias", "BiasFree"):
        out = jax.block_until_ready(
            layer_norm_pallas(x2, w2, b2, layer_norm_type=ln_type))
        ref = layer_norm_ref(x2, w2, b2, layer_norm_type=ln_type)
        err = float(jnp.max(jnp.abs(out - ref)))
        if err > 5e-5:
            ok = False
            print(f"MISMATCH (case2 {ln_type}): max abs err = {err}")

    if ok:
        print("KERNEL_OK")
</pallas_src>

<mosaic_0001>
module attributes {stable_mosaic.version = 11 : i64} {
  func.func @_layernorm_kernel(%arg0: i32, %arg1: i32, %arg2: memref<1x4x256xf32, #tpu.memory_space<vmem>>, %arg3: memref<4x1xf32, #tpu.memory_space<vmem>>, %arg4: memref<4x1xf32, #tpu.memory_space<vmem>>, %arg5: memref<1x4x256xf32, #tpu.memory_space<vmem>>) attributes {dimension_semantics = [#tpu.dimension_semantics<parallel>, #tpu.dimension_semantics<parallel>], iteration_bounds = array<i64: 2, 1>, scalar_prefetch = 0 : i64, scratch_operands = 0 : i64, tpu.core_type = #tpu.core_type<tc>, window_params = [{transform_indices = @transform_0, window_bounds = array<i64: 1, 4, 256>}, {pipeline_mode = #tpu.pipeline_mode<synchronous>, transform_indices = @transform_1, window_bounds = array<i64: 4, 1>}, {pipeline_mode = #tpu.pipeline_mode<synchronous>, transform_indices = @transform_2, window_bounds = array<i64: 4, 1>}, {transform_indices = @transform_3, window_bounds = array<i64: 1, 4, 256>}]} {
    %c0 = arith.constant 0 : index
    %c0_0 = arith.constant 0 : index
    %c0_1 = arith.constant 0 : index
    %0 = vector.load %arg2[%c0, %c0_0, %c0_1] : memref<1x4x256xf32, #tpu.memory_space<vmem>>, vector<1x4x256xf32>
    %cst = arith.constant dense<0.000000e+00> : vector<1x256xf32>
    %1 = vector.multi_reduction <add>, %0, %cst [1] : vector<1x4x256xf32> to vector<1x256xf32>
    %2 = vector.shape_cast %1 : vector<1x256xf32> to vector<1x1x256xf32>
    %cst_2 = arith.constant 2.500000e-01 : f32
    %3 = vector.broadcast %cst_2 : f32 to vector<1x1x256xf32>
    %4 = arith.mulf %2, %3 : vector<1x1x256xf32>
    %5 = vector.broadcast %4 : vector<1x1x256xf32> to vector<1x4x256xf32>
    %6 = arith.subf %0, %5 : vector<1x4x256xf32>
    %7 = arith.mulf %6, %6 : vector<1x4x256xf32>
    %cst_3 = arith.constant dense<0.000000e+00> : vector<1x256xf32>
    %8 = vector.multi_reduction <add>, %7, %cst_3 [1] : vector<1x4x256xf32> to vector<1x256xf32>
    %9 = vector.shape_cast %8 : vector<1x256xf32> to vector<1x1x256xf32>
    %cst_4 = arith.constant 2.500000e-01 : f32
    %10 = vector.broadcast %cst_4 : f32 to vector<1x1x256xf32>
    %11 = arith.mulf %9, %10 : vector<1x1x256xf32>
    %cst_5 = arith.constant 9.99999974E-6 : f32
    %12 = vector.broadcast %cst_5 : f32 to vector<1x1x256xf32>
    %13 = arith.addf %11, %12 : vector<1x1x256xf32>
    %14 = math.rsqrt %13 : vector<1x1x256xf32>
    %c0_6 = arith.constant 0 : index
    %c0_7 = arith.constant 0 : index
    %15 = vector.load %arg3[%c0_6, %c0_7] : memref<4x1xf32, #tpu.memory_space<vmem>>, vector<4x1xf32>
    %16 = vector.shape_cast %15 : vector<4x1xf32> to vector<1x4x1xf32>
    %c0_8 = arith.constant 0 : index
    %c0_9 = arith.constant 0 : index
    %17 = vector.load %arg4[%c0_8, %c0_9] : memref<4x1xf32, #tpu.memory_space<vmem>>, vector<4x1xf32>
    %18 = vector.shape_cast %17 : vector<4x1xf32> to vector<1x4x1xf32>
    %19 = vector.broadcast %14 : vector<1x1x256xf32> to vector<1x4x256xf32>
    %20 = vector.broadcast %16 : vector<1x4x1xf32> to vector<1x4x256xf32>
    %21 = arith.mulf %19, %20 : vector<1x4x256xf32>
    %22 = arith.mulf %6, %21 : vector<1x4x256xf32>
    %23 = vector.broadcast %18 : vector<1x4x1xf32> to vector<1x4x256xf32>
    %24 = arith.addf %22, %23 : vector<1x4x256xf32>
    %c0_10 = arith.constant 0 : index
    %c0_11 = arith.constant 0 : index
    %c0_12 = arith.constant 0 : index
    %25 = vector.load %arg5[%c0_10, %c0_11, %c0_12] : memref<1x4x256xf32, #tpu.memory_space<vmem>>, vector<1x4x256xf32>
    tpu.vector_store %arg5[%c0_10, %c0_11, %c0_12], %24 {strides = array<i32>} : memref<1x4x256xf32, #tpu.memory_space<vmem>>, vector<1x4x256xf32>,
    return
  }
  func.func @transform_0(%arg0: i32, %arg1: i32) -> (i32, i32, i32) {
    %c0_i32 = arith.constant 0 : i32
    %c0_i32_0 = arith.constant 0 : i32
    return %arg0, %c0_i32, %arg1 : i32, i32, i32
  }
  func.func @transform_1(%arg0: i32, %arg1: i32) -> (i32, i32) {
    %c0_i32 = arith.constant 0 : i32
    %c0_i32_0 = arith.constant 0 : i32
    %c0_i32_1 = arith.constant 0 : i32
    return %c0_i32, %c0_i32_0 : i32, i32
  }
  func.func @transform_2(%arg0: i32, %arg1: i32) -> (i32, i32) {
    %c0_i32 = arith.constant 0 : i32
    %c0_i32_0 = arith.constant 0 : i32
    %c0_i32_1 = arith.constant 0 : i32
    return %c0_i32, %c0_i32_0 : i32, i32
  }
  func.func @transform_3(%arg0: i32, %arg1: i32) -> (i32, i32, i32) {
    %c0_i32 = arith.constant 0 : i32
    %c0_i32_0 = arith.constant 0 : i32
    return %arg0, %c0_i32, %arg1 : i32, i32, i32
  }
}

</mosaic_0001>

<llo_original>
// kernel: tpu_custom_call.1
$region0: #{tpu_custom_call.1}
  #allocation0 [shape = 'u32[]', space=smem, size = 0x4, offset = 0x4, fixed_abs, tag = 'smem constant byte address 0x4 - core index']
  #allocation1 [shape = 'u32[72,128]{1,0:T(1,128)}', space=vmem, size = 0x9000, scoped, tag = 'internal scratch']
  %s0 = inlined_call_operand.hbm [shape: f32[2,4,256], index: 0, kind: input, shape index: {}]
  %s1 = inlined_call_operand.vmem [shape: f32[4,1], index: 1, kind: input, shape index: {}]
  %s2 = inlined_call_operand.vmem [shape: f32[4,1], index: 2, kind: input, shape index: {}]
  %s3 = inlined_call_operand.hbm [shape: f32[2,4,256], index: 3, kind: output, shape index: {}]
  %s4 = sld [smem:[#allocation0]]
  $region49: #{tpu_custom_call.1} parent=0
    _
  %s6 = ssub.s32 1, %s4
  %s7 = scalar_select 0, %s6, %s4
  $region1: #{tpu_custom_call.1} parent=0
    #allocation2 [shape = 'u8[8192]{0}', space=vmem, size = 0x2000, scoped, tag = 'input window, operand 0']
    #allocation3 [shape = 's32[2]{0}', space=sflag, size = 0x8, scoped, tag = 'scoped memory for tpu_custom_call.1']
    #allocation4 [shape = 's32[2]{0}', space=sflag, size = 0x8, scoped, tag = 'scoped memory for tpu_custom_call.1']
    #allocation5 [shape = 'u8[8192]{0}', space=vmem, size = 0x2000, scoped, tag = 'output window, operand 0']
    %8 = vsyncpa [#allocation3], 0
    %s9 = scalar_lea.sflag [#allocation3], 1
    %10 = vsyncpa %s9, 0
    %11 = vsyncpa [#allocation4], 0
    %s12 = scalar_lea.sflag [#allocation4], 1
    %13 = vsyncpa %s12, 0
    loop: start=0, step=1, limit=4
    $region2: #{tpu_custom_call.1} parent=1 // loop_pre_header
      _
    $region3: #{tpu_custom_call.1} parent=1 // loop_header
      %s15 = sphi 0, %s19
      %p16 = scmp.ge.s32.totalorder %s15, 4
      %s22 = sphi 0, %s34
      %s23 = sphi 0, %s30
      %s24 = sphi 0, %s22
      %s25 = sphi 0, %s23
      %s26 = sphi 0, %s24
      %s27 = sphi 0, %s25
      %s39 = sphi 0, %s41
      %s42 = sphi 0, %s39
      %s43 = sphi 0, %s42
      %s59 = sphi 0, %s43
      %s63 = sphi 0, %s63
      %s65 = sphi 0, %s63
      %s66 = sphi 0, %s65
      %s80 = sphi 0, %s66
      %s84 = sphi 0, %s84
      %s86 = sphi 0, %s84
      %s87 = sphi 0, %s86
      %s101 = sphi 0, %s87
      %s109 = sphi 0, %s111
      %s112 = sphi 0, %s109
      %s113 = sphi 0, %s112
      %s129 = sphi 0, %s113
    $region4: #{tpu_custom_call.1} parent=1 // loop_header_branch
      %18 = sbr.rel (%p16) target = $region8
    $region5: #{tpu_custom_call.1} parent=1 // loop_body
      %s20 = ssub.s32 %s15, 1
      %s21 = ssub.s32 %s15, 2
      %s28 = sadd.s32 1, %s23
      %p29 = scmp.ge.s32.totalorder %s28, 1
      %s30 = scalar_select %p29, 0, %s28
      %s31 = sadd.s32 1, %s22
      %s32 = scalar_select %p29, %s31, %s22
      %p33 = scmp.ge.s32.totalorder %s32, 2
      %s34 = scalar_select %p33, 0, %s32
      %s35 = ssub.s32 %s22, %s34
      %s36 = ssub.s32 %s23, %s30
      %s37 = sor.u32 %s35, %s36
      %p38 = scmp.eq.s32.totalorder %s37, 0
      %s40 = sadd.s32 %s39, 1
      %s41 = scalar_select %p38, %s39, %s40
      %p44 = pneg %p38
      %p45 = scmp.eq.s32.totalorder %s15, 1
      %p46 = por %p44, %p45
      %p47 = scmp.ne.s32.totalorder %s39, %s42
      %p48 = scmp.eq.s32.totalorder %s15, 0
      %p49 = por %p47, %p48
      %p50 = scmp.ne.s32.totalorder %s39, %s42
      %p51 = scmp.eq.s32.totalorder %s20, 1
      %p52 = por %p50, %p51
      %p53 = scmp.ne.s32.totalorder %s42, %s43
      %p54 = scmp.eq.s32.totalorder %s20, 0
      %p55 = por %p53, %p54
      %p56 = scmp.ne.s32.totalorder %s42, %s43
      %p57 = scmp.eq.s32.totalorder %s21, 1
      %p58 = por %p56, %p57
      %p60 = scmp.ne.s32.totalorder %s43, %s59
      %p61 = scmp.eq.s32.totalorder %s21, 0
      %p62 = por %p60, %p61
      %s64 = sadd.s32 %s63, 1
      %p67 = scmp.eq.s32.totalorder %s15, 1
      %p68 = scmp.ne.s32.totalorder %s63, %s65
      %p69 = scmp.eq.s32.totalorder %s15, 0
      %p70 = por %p68, %p69
      %p71 = scmp.ne.s32.totalorder %s63, %s65
      %p72 = scmp.eq.s32.totalorder %s20, 1
      %p73 = por %p71, %p72
      %p74 = scmp.ne.s32.totalorder %s65, %s66
      %p75 = scmp.eq.s32.totalorder %s20, 0
      %p76 = por %p74, %p75
      %p77 = scmp.ne.s32.totalorder %s65, %s66
      %p78 = scmp.eq.s32.totalorder %s21, 1
      %p79 = por %p77, %p78
      %p81 = scmp.ne.s32.totalorder %s66, %s80
      %p82 = scmp.eq.s32.totalorder %s21, 0
      %p83 = por %p81, %p82
      %s85 = sadd.s32 %s84, 1
      %p88 = scmp.eq.s32.totalorder %s15, 1
      %p89 = scmp.ne.s32.totalorder %s84, %s86
      %p90 = scmp.eq.s32.totalorder %s15, 0
      %p91 = por %p89, %p90
      %p92 = scmp.ne.s32.totalorder %s84, %s86
      %p93 = scmp.eq.s32.totalorder %s20, 1
      %p94 = por %p92, %p93
      %p95 = scmp.ne.s32.totalorder %s86, %s87
      %p96 = scmp.eq.s32.totalorder %s20, 0
      %p97 = por %p95, %p96
      %p98 = scmp.ne.s32.totalorder %s86, %s87
      %p99 = scmp.eq.s32.totalorder %s21, 1
      %p100 = por %p98, %p99
      %p102 = scmp.ne.s32.totalorder %s87, %s101
      %p103 = scmp.eq.s32.totalorder %s21, 0
      %p104 = por %p102, %p103
      %s105 = ssub.s32 %s22, %s34
      %s106 = ssub.s32 %s23, %s30
      %s107 = sor.u32 %s105, %s106
      %p108 = scmp.eq.s32.totalorder %s107, 0
      %s110 = sadd.s32 %s109, 1
      %s111 = scalar_select %p108, %s109, %s110
      %p114 = pneg %p108
      %p115 = scmp.eq.s32.totalorder %s15, 1
      %p116 = por %p114, %p115
      %p117 = scmp.ne.s32.totalorder %s109, %s112
      %p118 = scmp.eq.s32.totalorder %s15, 0
      %p119 = por %p117, %p118
      %p120 = scmp.ne.s32.totalorder %s109, %s112
      %p121 = scmp.eq.s32.totalorder %s20, 1
      %p122 = por %p120, %p121
      %p123 = scmp.ne.s32.totalorder %s112, %s113
      %p124 = scmp.eq.s32.totalorder %s20, 0
      %p125 = por %p123, %p124
      %p126 = scmp.ne.s32.totalorder %s112, %s113
      %p127 = scmp.eq.s32.totalorder %s21, 1
      %p128 = por %p126, %p127
      %p130 = scmp.ne.s32.totalorder %s113, %s129
      %p131 = scmp.eq.s32.totalorder %s21, 0
      %p132 = por %p130, %p131
      %p133 = scmp.le.s32.totalorder 1, %s15
      %p134 = scmp.lt.s32.totalorder %s15, 3
      %p135 = pnand %p133, %p134
      %p136 = pneg %p135
      // Predicated region
      $region9: #{tpu_custom_call.1} parent=5 // pred_check
        _
      $region10: #{tpu_custom_call.1} parent=5 // pred_check_branch
        %138 = sbr.rel (%p135) target = $region12
      $region11: #{tpu_custom_call.1} parent=5 // pred_region
        %s139 = ssub.s32 %s15, 1
        // Predicated region
        $region13: #{tpu_custom_call.1} parent=11 // pred_check
          %p140 = pneg %p76
        $region14: #{tpu_custom_call.1} parent=11 // pred_check_branch
          %142 = sbr.rel (%p140) target = $region16
        $region15: #{tpu_custom_call.1} parent=11 // pred_region
          _
        $region16: #{tpu_custom_call.1} parent=11 // pred_fallthru
          _
        // Predicated region
        $region17: #{tpu_custom_call.1} parent=11 // pred_check
          %p143 = pneg %p97
        $region18: #{tpu_custom_call.1} parent=11 // pred_check_branch
          %145 = sbr.rel (%p143) target = $region20
        $region19: #{tpu_custom_call.1} parent=11 // pred_region
          _
        $region20: #{tpu_custom_call.1} parent=11 // pred_fallthru
          _
      $region12: #{tpu_custom_call.1} parent=5 // pred_fallthru
        _
      %p146 = scmp.lt.s32.totalorder %s15, 2
      // Predicated region
      $region21: #{tpu_custom_call.1} parent=5 // pred_check
        %p147 = pneg %p146
      $region22: #{tpu_custom_call.1} parent=5 // pred_check_branch
        %149 = sbr.rel (%p147) target = $region24
      $region23: #{tpu_custom_call.1} parent=5 // pred_region
        // Predicated region
        $region25: #{tpu_custom_call.1} parent=23 // pred_check
          %p150 = pneg %p49
        $region26: #{tpu_custom_call.1} parent=23 // pred_check_branch
          %152 = sbr.rel (%p150) target = $region28
        $region27: #{tpu_custom_call.1} parent=23 // pred_region
          %s153 = sand.u32 %s39, 1
          %s154 = scalar_lea.sflag [#allocation3], %s153
          %s155 = sand.u32 %s39, 1
          %s156 = smul.addr %s155, 8
          %s157 = scalar_lea.vmem [#allocation2], %s156
          %s158 = smul.u32 2, %s23
          %160 = vsyncadd %s154, 0
          %s161 = smul.addr %s22, 2
          %s162 = sadd.s32 %s158, %s161
          %s163 = smul.addr %s162, 4
          %s164 = scalar_lea.hbm %s0, %s163
          %s166 = sshll.u32 %s164, 4
          %s167 = int_to_ptr.hbm [resolvable:$true] %s166
          %s168 = sshll.u32 %s157, 4
          %s169 = int_to_ptr.vmem [resolvable:$true] %s168
          %171 = dma.hbm_to_vmem [thread:$0]  %s167, 128, %s169, %s154
        $region28: #{tpu_custom_call.1} parent=23 // pred_fallthru
          _
      $region24: #{tpu_custom_call.1} parent=5 // pred_fallthru
        _
      %p172 = scmp.le.s32.totalorder 1, %s15
      %p173 = scmp.lt.s32.totalorder %s15, 3
      %p174 = pnand %p172, %p173
      %p175 = pneg %p174
      // Predicated region
      $region29: #{tpu_custom_call.1} parent=5 // pred_check
        _
      $region30: #{tpu_custom_call.1} parent=5 // pred_check_branch
        %177 = sbr.rel (%p174) target = $region32
      $region31: #{tpu_custom_call.1} parent=5 // pred_region
        %s178 = ssub.s32 %s15, 1
        %s179 = sand.u32 %s42, 1
        %s180 = scalar_lea.sflag [#allocation3], %s179
        %s181 = sand.u32 %s42, 1
        %s182 = smul.addr %s181, 8
        %s183 = scalar_lea.vmem [#allocation2], %s182
        // Predicated region
        $region33: #{tpu_custom_call.1} parent=31 // pred_check
          %p184 = pneg %p55
        $region34: #{tpu_custom_call.1} parent=31 // pred_check_branch
          %186 = sbr.rel (%p184) target = $region36
        $region35: #{tpu_custom_call.1} parent=31 // pred_region
          %188 = dma.done %s180, 128
        $region36: #{tpu_custom_call.1} parent=31 // pred_fallthru
          _
        %s189 = sand.u32 %s42, 1
        %s190 = scalar_lea.sflag [#allocation3], %s189
        %s191 = sand.u32 %s42, 1
        %s192 = smul.addr %s191, 8
        %s193 = scalar_lea.vmem [#allocation2], %s192
        %p194 = pneg %p55
        %p195 = pneg %p52
        %p196 = pneg %p76
        %p197 = pneg %p73
        %p198 = pneg %p97
        %p199 = pneg %p94
        %p200 = pneg %p125
        %p201 = pneg %p122
        %s202 = sand.u32 %s112, 1
        %s203 = scalar_lea.sflag [#allocation4], %s202
        %s204 = sand.u32 %s112, 1
        %s205 = smul.addr %s204, 8
        %s206 = scalar_lea.vmem [#allocation5], %s205
        %s207 = smul.u32 2, %s25
        %s208 = smul.u32 2, %s25
        %v209 = vld [vmem:[%s183] sm:$0xff]
        %211 = vst [vmem:[#allocation1] ss:$2 sm:$0xff] %v209
        %v212 = vld.sshfl [vmem:[#allocation1] sm:$0xff pattern:$0x75316420]
        %v213 = vld.sshfl [vmem:[#allocation1 + $0x8] sm:$0xff pattern:$0x75316420]
        %vm216 = vcmask 1043456
        %v217 = vsel %vm216, %v212, 0.0
        %v218 = vrot.slane %v217, 4
        %v219 = vadd.f32 %v217, %v218
        %v220 = vrot.slane %v219, 2
        %v221 = vadd.f32 %v219, %v220
        %v222 = vrot.slane %v221, 1
        %v223 = vadd.f32 %v221, %v222
        %v224 = vsel %vm216, %v213, 0.0
        %v225 = vrot.slane %v224, 4
        %v226 = vadd.f32 %v224, %v225
        %v227 = vrot.slane %v226, 2
        %v228 = vadd.f32 %v226, %v227
        %v229 = vrot.slane %v228, 1
        %v230 = vadd.f32 %v228, %v229
        %v231 = vmul.f32 %v223, 0.25
        %v232 = vmul.f32 %v230, 0.25
        %v235 = vrot.slane %v232, 4
        %v236 = vsel %vm216, %v231, %v235
        %v238 = vsub.f32 %v209, %v236
        %v239 = vmul.f32 %v238, %v238
        %241 = vst [vmem:[#allocation1] ss:$2 sm:$0xff] %v239
        %v242 = vld.sshfl [vmem:[#allocation1] sm:$0xff pattern:$0x75316420]
        %v243 = vld.sshfl [vmem:[#allocation1 + $0x8] sm:$0xff pattern:$0x75316420]
        %v246 = vsel %vm216, %v242, 0.0
        %v247 = vrot.slane %v246, 4
        %v248 = vadd.f32 %v246, %v247
        %v249 = vrot.slane %v248, 2
        %v250 = vadd.f32 %v248, %v249
        %v251 = vrot.slane %v250, 1
        %v252 = vadd.f32 %v250, %v251
        %v253 = vsel %vm216, %v243, 0.0
        %v254 = vrot.slane %v253, 4
        %v255 = vadd.f32 %v253, %v254
        %v256 = vrot.slane %v255, 2
        %v257 = vadd.f32 %v255, %v256
        %v258 = vrot.slane %v257, 1
        %v259 = vadd.f32 %v257, %v258
        %v260 = vmul.f32 %v252, 0.25
        %v261 = vmul.f32 %v259, 0.25
        %v262 = vadd.f32 %v260, 1e-05
        %v263 = vadd.f32 %v261, 1e-05
        %v264 = vrsqrt.pop %v262
        %v265 = vmul.f32 %v264, %v262
        %v266 = vmul.f32 %v265, %v264
        %v267 = vmul.f32 0.5, %v266
        %v268 = vsub.f32 1.5, %v267
        %v269 = vmul.f32 %v264, %v268
        %vm270 = vweird.f32 %v262
        %vm271 = vweird.f32 %v264
        %vm272 = vmor %vm270, %vm271
        %v273 = vsel %vm272, %v264, %v269
        %v274 = vrsqrt.pop %v263
        %v275 = vmul.f32 %v274, %v263
        %v276 = vmul.f32 %v275, %v274
        %v277 = vmul.f32 0.5, %v276
        %v278 = vsub.f32 1.5, %v277
        %v279 = vmul.f32 %v274, %v278
        %vm280 = vweird.f32 %v263
        %vm281 = vweird.f32 %v274
        %vm282 = vmor %vm280, %vm281
        %v283 = vsel %vm282, %v274, %v279
        %v284 = vld [vmem:[%s1] sm:$0xf]
        %v285 = vld [vmem:[%s2] sm:$0xf]
        %287 = vset.pattern.permute.xlu0 0
        %288 = vperm.xlu0 %287, %v284
        %v289 = vpop.permute.xlu0 %288
        %v291 = vmul.f32 %v273, %v289
        %v292 = vmul.f32 %v283, %v289
        %v295 = vrot.slane %v292, 4
        %v296 = vsel %vm216, %v291, %v295
        %v298 = vmul.f32 %v238, %v296
        %300 = vset.pattern.permute.xlu0 0
        %301 = vperm.xlu0 %300, %v285
        %v302 = vpop.permute.xlu0 %301
        %v304 = vunpack.c.l.s4 839922192
        %v305 = vunpack.c.0.s8 %v304
        %v306 = vperm.slane %v302, %v305
        %v308 = vadd.f32 %v298, %v306
        %309 = vst [vmem:[%s206] sm:$0xff] %v308
        %s310 = sand.u32 %s112, 1
        %s311 = scalar_lea.sflag [#allocation4], %s310
        %s312 = sand.u32 %s112, 1
        %s313 = smul.addr %s312, 8
        %s314 = scalar_lea.vmem [#allocation5], %s313
        // Predicated region
        $region37: #{tpu_custom_call.1} parent=31 // pred_check
          %p315 = pneg %p122
        $region38: #{tpu_custom_call.1} parent=31 // pred_check_branch
          %317 = sbr.rel (%p315) target = $region40
        $region39: #{tpu_custom_call.1} parent=31 // pred_region
          %s318 = smul.u32 2, %s25
          %320 = vsyncadd %s311, 0
          %s321 = smul.addr %s24, 2
          %s322 = sadd.s32 %s318, %s321
          %s323 = smul.addr %s322, 4
          %s324 = scalar_lea.hbm %s3, %s323
          %s326 = sshll.u32 %s314, 4
          %s327 = int_to_ptr.vmem [resolvable:$true] %s326
          %s328 = sshll.u32 %s324, 4
          %s329 = int_to_ptr.hbm [resolvable:$true] %s328
          %331 = dma.vmem_to_hbm [thread:$0]  %s327, 128, %s329, %s311
        $region40: #{tpu_custom_call.1} parent=31 // pred_fallthru
          _
      $region32: #{tpu_custom_call.1} parent=5 // pred_fallthru
        _
      %p332 = scmp.le.s32.totalorder 2, %s15
      // Predicated region
      $region41: #{tpu_custom_call.1} parent=5 // pred_check
        %p333 = pneg %p332
      $region42: #{tpu_custom_call.1} parent=5 // pred_check_branch
        %335 = sbr.rel (%p333) target = $region44
      $region43: #{tpu_custom_call.1} parent=5 // pred_region
        %s336 = ssub.s32 %s15, 2
        // Predicated region
        $region45: #{tpu_custom_call.1} parent=43 // pred_check
          %p337 = pneg %p128
        $region46: #{tpu_custom_call.1} parent=43 // pred_check_branch
          %339 = sbr.rel (%p337) target = $region48
        $region47: #{tpu_custom_call.1} parent=43 // pred_region
          %s340 = sand.u32 %s113, 1
          %s341 = scalar_lea.sflag [#allocation4], %s340
          %s342 = sand.u32 %s113, 1
          %s343 = smul.addr %s342, 8
          %s344 = scalar_lea.vmem [#allocation5], %s343
          %346 = dma.done %s341, 128
        $region48: #{tpu_custom_call.1} parent=43 // pred_fallthru
          _
      $region44: #{tpu_custom_call.1} parent=5 // pred_fallthru
        _
    $region6: #{tpu_custom_call.1} parent=1 // loop_footer
      %s19 = sadd.s32 1, %s15
    $region7: #{tpu_custom_call.1} parent=1 // loop_footer_branch
      %14 = sbr.rel target = $region3
    $region8: #{tpu_custom_call.1} parent=1 // loop_exit
      _
    %347 = vsyncpa [#allocation3], 1
    %s348 = scalar_lea.sflag [#allocation3], 1
    %349 = vsyncpa %s348, 1
    %350 = vsyncpa [#allocation4], 1
    %s351 = scalar_lea.sflag [#allocation4], 1
    %352 = vsyncpa %s351, 1

</llo_original>
